<compile_context>
chip_gen: v7x
topology: tpu7x:2x2x1
jax: 0.10.0
libtpu: 0.0.40
codegen_flags: <defaults>
</compile_context>

<pallas_src>
import functools

import jax
import jax.numpy as jnp
from jax.experimental import pallas as pl
from jax.experimental.pallas import tpu as pltpu

EPS = 1e-5
LANE = 128


def _round_up(n, m):
    return ((n + m - 1) // m) * m


# ----------------------------------------------------------------------------
# Kernel
# ----------------------------------------------------------------------------
def actor_kernel(x_ref, w1_ref, w23_ref, vec_ref, o_ref):
    x = x_ref[...]                           # (B, S) f32
    Hp = w1_ref.shape[1]
    Ap = w23_ref.shape[1] - Hp
    A = o_ref.shape[1]
    inv_b = 1.0 / x.shape[0]                 # static batch size

    w1 = w1_ref[...]                         # (S, Hp)      bf16
    w2 = w23_ref[:, :Hp]                     # (Hp, Hp)     bf16 (lane-aligned slice)
    w3 = w23_ref[:, Hp:]                     # (Hp, Ap)     bf16
    vecs = vec_ref[...]                      # (7, P)       f32
    b1, g1, be1 = vecs[0:1, :Hp], vecs[1:2, :Hp], vecs[2:3, :Hp]
    b2, g2, be2 = vecs[3:4, :Hp], vecs[4:5, :Hp], vecs[5:6, :Hp]
    b3 = vecs[6:7, :Ap]

    def bn_train(a, gamma, beta):
        # Single-pass BatchNorm1d (training mode, biased variance).
        # Safe: `a` is tanh output, bounded in [-1, 1].
        s1 = jnp.sum(a, axis=0, keepdims=True)
        s2 = jnp.sum(a * a, axis=0, keepdims=True)
        mean = s1 * inv_b
        var = jnp.maximum(s2 * inv_b - mean * mean, 0.0)
        scale = gamma * jax.lax.rsqrt(var + EPS)   # EUP
        shift = beta - mean * scale
        return a * scale + shift                   # fused mul-add on VPU

    def dot_bf16(a, w):
        # MXU matmul: bf16 inputs, f32 accumulation.
        return jnp.dot(a.astype(jnp.bfloat16), w,
                       preferred_element_type=jnp.float32)

    # l1 + tanh, bn1
    a = jnp.tanh(dot_bf16(x, w1) + b1)
    a = bn_train(a, g1, be1)
    # l2 + tanh, bn2
    a = jnp.tanh(dot_bf16(a, w2) + b2)
    a = bn_train(a, g2, be2)
    # l3 + tanh
    a = jnp.tanh(dot_bf16(a, w3) + b3)       # (B, Ap); padded cols are exactly 0

    # Write the real action_dim directly (single masked store; avoids a
    # separate post-call slice kernel).
    o_ref[...] = a[:, :A].astype(o_ref.dtype)


# ----------------------------------------------------------------------------
# One-time parameter preparation (pad + cast, hoisted out of the forward)
# ----------------------------------------------------------------------------
def prepare_params(params):
    """Pad feature axes to full 128-lane width, cast weights to bf16, and
    pack everything into 3 arrays.  Call once; reuse across forwards."""
    (w1, b1, g1, be1, w2, b2, g2, be2, w3, b3) = params
    S, H = w1.shape
    A = w3.shape[1]
    Hp = _round_up(H, LANE)
    Ap = _round_up(A, LANE)
    P = max(Hp, Ap)

    def pad_cols(a, cols, value=0.0):
        return jnp.pad(a, ((0, 0), (0, cols - a.shape[-1])),
                       constant_values=value)

    def pad_rows(a, rows):
        return jnp.pad(a, ((0, rows - a.shape[0]), (0, 0)))

    def row(v, value=0.0):
        v = v.reshape(1, -1).astype(jnp.float32)
        return pad_cols(v, P, value=value)

    # Padded feature columns provably stay exactly 0 through every layer
    # (zero weight columns/rows, zero bias/beta), so real outputs are
    # unchanged and the final slice to action_dim is exact.
    w1p = pad_cols(w1, Hp).astype(jnp.bfloat16)                       # (S, Hp)
    w2p = pad_cols(pad_rows(w2, Hp), Hp)                              # (Hp, Hp)
    w3p = pad_cols(pad_rows(w3, Hp), Ap)                              # (Hp, Ap)
    w23p = jnp.concatenate([w2p, w3p], axis=1).astype(jnp.bfloat16)   # (Hp, Hp+Ap)

    vecs = jnp.concatenate([
        row(b1), row(g1, 1.0), row(be1),
        row(b2), row(g2, 1.0), row(be2),
        row(b3),
    ], axis=0)                                                        # (7, P) f32

    return (jax.block_until_ready(w1p),
            jax.block_until_ready(w23p),
            jax.block_until_ready(vecs))


# ----------------------------------------------------------------------------
# Forward wrapper
# ----------------------------------------------------------------------------
@functools.partial(jax.jit, static_argnames=("action_dim",))
def actor_forward(x, w1p, w23p, vecs, *, action_dim):
    x = x.astype(jnp.float32)                # state.float()
    B, S = x.shape
    Hp = w1p.shape[1]
    Ap = w23p.shape[1] - Hp

    cost = pl.CostEstimate(
        flops=2 * B * (S * Hp + Hp * Hp + Hp * Ap),
        transcendentals=B * (2 * Hp + Ap) + 4 * Hp,
        bytes_accessed=(x.size * 4 + w1p.size * 2 + w23p.size * 2
                        + vecs.size * 4 + B * action_dim * 4),
    )

    vmem_spec = pl.BlockSpec(memory_space=pltpu.MemorySpace.VMEM)
    return pl.pallas_call(
        actor_kernel,
        out_shape=jax.ShapeDtypeStruct((B, action_dim), jnp.float32),
        in_specs=[vmem_spec] * 4,
        out_specs=vmem_spec,
        cost_estimate=cost,
    )(x, w1p, w23p, vecs)


# ----------------------------------------------------------------------------
# Parameter init (matches PyTorch defaults)
# ----------------------------------------------------------------------------
def init_actor_params(key, state_dim, action_dim):
    hidden_dim = 1 if state_dim == 0 else 2 ** (state_dim - 1).bit_length()

    def linear_init(k, fan_in, fan_out):
        kw, kb = jax.random.split(k)
        bound = 1.0 / jnp.sqrt(jnp.float32(fan_in))
        w = jax.random.uniform(kw, (fan_in, fan_out), jnp.float32, -bound, bound)
        b = jax.random.uniform(kb, (1, fan_out), jnp.float32, -bound, bound)
        return w, b

    k1, k2, k3 = jax.random.split(key, 3)
    w1, b1 = linear_init(k1, state_dim, hidden_dim)
    w2, b2 = linear_init(k2, hidden_dim, hidden_dim)
    w3, b3 = linear_init(k3, hidden_dim, action_dim)

    g1 = jnp.ones((1, hidden_dim), jnp.float32)
    be1 = jnp.zeros((1, hidden_dim), jnp.float32)
    g2 = jnp.ones((1, hidden_dim), jnp.float32)
    be2 = jnp.zeros((1, hidden_dim), jnp.float32)

    return (w1, b1, g1, be1, w2, b2, g2, be2, w3, b3), hidden_dim


# ----------------------------------------------------------------------------
# References
# ----------------------------------------------------------------------------
def reference_mirror(x, params):
    """Plain-JAX mirror of the kernel math (bf16 matmul inputs, 1-pass BN)."""
    (w1, b1, g1, be1, w2, b2, g2, be2, w3, b3) = params
    x = x.astype(jnp.float32)
    inv_b = 1.0 / x.shape[0]

    def bn(a, gamma, beta):
        s1 = jnp.sum(a, axis=0, keepdims=True)
        s2 = jnp.sum(a * a, axis=0, keepdims=True)
        mean = s1 * inv_b
        var = jnp.maximum(s2 * inv_b - mean * mean, 0.0)
        scale = gamma * jax.lax.rsqrt(var + EPS)
        return a * scale + (beta - mean * scale)

    def dotb(a, w):
        return jnp.dot(a.astype(jnp.bfloat16), w.astype(jnp.bfloat16),
                       preferred_element_type=jnp.float32)

    a = jnp.tanh(dotb(x, w1) + b1)
    a = bn(a, g1, be1)
    a = jnp.tanh(dotb(a, w2) + b2)
    a = bn(a, g2, be2)
    a = jnp.tanh(dotb(a, w3) + b3)
    return a


def reference_f32(x, params):
    """Pure-f32, two-pass-variance reference (module semantics)."""
    (w1, b1, g1, be1, w2, b2, g2, be2, w3, b3) = params
    x = x.astype(jnp.float32)

    def bn(a, gamma, beta):
        mean = jnp.mean(a, axis=0, keepdims=True)
        var = jnp.mean((a - mean) ** 2, axis=0, keepdims=True)
        return gamma * (a - mean) * jax.lax.rsqrt(var + EPS) + beta

    a = jnp.tanh(x @ w1 + b1)
    a = bn(a, g1, be1)
    a = jnp.tanh(a @ w2 + b2)
    a = bn(a, g2, be2)
    a = jnp.tanh(a @ w3 + b3)
    return a


# ----------------------------------------------------------------------------
if __name__ == "__main__":
    key = jax.random.PRNGKey(0)
    kx, kp = jax.random.split(key)

    state_dim, action_dim, batch = 16, 4, 8
    params, hidden_dim = init_actor_params(kp, state_dim, action_dim)
    prepared = prepare_params(params)        # one-time pad/cast/pack

    x = jax.random.normal(kx, (batch, state_dim), jnp.float32)

    out = jax.block_until_ready(
        actor_forward(x, *prepared, action_dim=action_dim))
    assert out.shape == (batch, action_dim)

    # Tight check against an exact-mirror JAX reference (same bf16 dots,
    # same single-pass BN).
    ref_m = reference_mirror(x, params)
    assert jnp.allclose(out, ref_m, atol=2e-3, rtol=0.0), \
        "mismatch vs mirrored JAX reference"

    # Loose sanity check against the pure-f32 / two-pass-variance reference
    # (differences come only from bf16 matmul inputs).
    ref_f = reference_f32(x, params)
    assert jnp.allclose(out, ref_f, atol=5e-2, rtol=0.0), \
        "mismatch vs f32 module reference"

    print("KERNEL_OK")
</pallas_src>

<mosaic_0001>
module attributes {stable_mosaic.version = 11 : i64} {
  func.func @actor_kernel(%arg0: memref<8x16xf32, #tpu.memory_space<vmem>>, %arg1: memref<16x128xbf16, #tpu.memory_space<vmem>>, %arg2: memref<128x256xbf16, #tpu.memory_space<vmem>>, %arg3: memref<7x128xf32, #tpu.memory_space<vmem>>, %arg4: memref<8x4xf32, #tpu.memory_space<vmem>>) attributes {dimension_semantics = [], scalar_prefetch = 0 : i64, scratch_operands = 0 : i64, tpu.core_type = #tpu.core_type<tc>} {
    %c0 = arith.constant 0 : index
    %c0_0 = arith.constant 0 : index
    %0 = vector.load %arg0[%c0, %c0_0] : memref<8x16xf32, #tpu.memory_space<vmem>>, vector<8x16xf32>
    %c0_1 = arith.constant 0 : index
    %c0_2 = arith.constant 0 : index
    %1 = vector.load %arg1[%c0_1, %c0_2] : memref<16x128xbf16, #tpu.memory_space<vmem>>, vector<16x128xbf16>
    %c0_3 = arith.constant 0 : index
    %c0_4 = arith.constant 0 : index
    %2 = vector.load %arg2[%c0_3, %c0_4] : memref<128x256xbf16, #tpu.memory_space<vmem>>, vector<128x128xbf16>
    %c0_5 = arith.constant 0 : index
    %c128 = arith.constant 128 : index
    %3 = vector.load %arg2[%c0_5, %c128] : memref<128x256xbf16, #tpu.memory_space<vmem>>, vector<128x128xbf16>
    %c0_6 = arith.constant 0 : index
    %c0_7 = arith.constant 0 : index
    %4 = vector.load %arg3[%c0_6, %c0_7] : memref<7x128xf32, #tpu.memory_space<vmem>>, vector<7x128xf32>
    %5 = vector.extract_strided_slice %4 {offsets = [0, 0], sizes = [1, 128], strides = [1, 1]} : vector<7x128xf32> to vector<1x128xf32>
    %6 = vector.extract_strided_slice %4 {offsets = [1, 0], sizes = [1, 128], strides = [1, 1]} : vector<7x128xf32> to vector<1x128xf32>
    %7 = vector.extract_strided_slice %4 {offsets = [2, 0], sizes = [1, 128], strides = [1, 1]} : vector<7x128xf32> to vector<1x128xf32>
    %8 = vector.extract_strided_slice %4 {offsets = [3, 0], sizes = [1, 128], strides = [1, 1]} : vector<7x128xf32> to vector<1x128xf32>
    %9 = vector.extract_strided_slice %4 {offsets = [4, 0], sizes = [1, 128], strides = [1, 1]} : vector<7x128xf32> to vector<1x128xf32>
    %10 = vector.extract_strided_slice %4 {offsets = [5, 0], sizes = [1, 128], strides = [1, 1]} : vector<7x128xf32> to vector<1x128xf32>
    %11 = vector.extract_strided_slice %4 {offsets = [6, 0], sizes = [1, 128], strides = [1, 1]} : vector<7x128xf32> to vector<1x128xf32>
    %12 = arith.truncf %0 : vector<8x16xf32> to vector<8x16xbf16>
    %cst = arith.constant dense<0.000000e+00> : vector<8x128xf32>
    %13 = tpu.matmul %12, %1, %cst {dimension_numbers = #tpu.dot_dimension_numbers<[1], [0], [0], [1], [0, 0, 1, 1], [], []>} : vector<8x16xbf16>, vector<16x128xbf16>, vector<8x128xf32> -> vector<8x128xf32>
    %14 = vector.broadcast %5 : vector<1x128xf32> to vector<8x128xf32>
    %15 = arith.addf %13, %14 : vector<8x128xf32>
    %16 = math.tanh %15 : vector<8x128xf32>
    %cst_8 = arith.constant dense<0.000000e+00> : vector<128xf32>
    %17 = vector.multi_reduction <add>, %16, %cst_8 [0] : vector<8x128xf32> to vector<128xf32>
    %18 = vector.shape_cast %17 : vector<128xf32> to vector<1x128xf32>
    %19 = arith.mulf %16, %16 : vector<8x128xf32>
    %cst_9 = arith.constant dense<0.000000e+00> : vector<128xf32>
    %20 = vector.multi_reduction <add>, %19, %cst_9 [0] : vector<8x128xf32> to vector<128xf32>
    %21 = vector.shape_cast %20 : vector<128xf32> to vector<1x128xf32>
    %cst_10 = arith.constant 1.250000e-01 : f32
    %22 = vector.broadcast %cst_10 : f32 to vector<1x128xf32>
    %23 = arith.mulf %18, %22 : vector<1x128xf32>
    %cst_11 = arith.constant 1.250000e-01 : f32
    %24 = vector.broadcast %cst_11 : f32 to vector<1x128xf32>
    %25 = arith.mulf %21, %24 : vector<1x128xf32>
    %26 = arith.mulf %23, %23 : vector<1x128xf32>
    %27 = arith.subf %25, %26 : vector<1x128xf32>
    %cst_12 = arith.constant 0.000000e+00 : f32
    %28 = vector.broadcast %cst_12 : f32 to vector<1x128xf32>
    %29 = arith.maximumf %27, %28 : vector<1x128xf32>
    %cst_13 = arith.constant 9.99999974E-6 : f32
    %30 = vector.broadcast %cst_13 : f32 to vector<1x128xf32>
    %31 = arith.addf %29, %30 : vector<1x128xf32>
    %32 = math.rsqrt %31 : vector<1x128xf32>
    %33 = arith.mulf %6, %32 : vector<1x128xf32>
    %34 = arith.mulf %23, %33 : vector<1x128xf32>
    %35 = arith.subf %7, %34 : vector<1x128xf32>
    %36 = vector.broadcast %33 : vector<1x128xf32> to vector<8x128xf32>
    %37 = arith.mulf %16, %36 : vector<8x128xf32>
    %38 = vector.broadcast %35 : vector<1x128xf32> to vector<8x128xf32>
    %39 = arith.addf %37, %38 : vector<8x128xf32>
    %40 = arith.truncf %39 : vector<8x128xf32> to vector<8x128xbf16>
    %cst_14 = arith.constant dense<0.000000e+00> : vector<8x128xf32>
    %41 = tpu.matmul %40, %2, %cst_14 {dimension_numbers = #tpu.dot_dimension_numbers<[1], [0], [0], [1], [0, 0, 1, 1], [], []>} : vector<8x128xbf16>, vector<128x128xbf16>, vector<8x128xf32> -> vector<8x128xf32>
    %42 = vector.broadcast %8 : vector<1x128xf32> to vector<8x128xf32>
    %43 = arith.addf %41, %42 : vector<8x128xf32>
    %44 = math.tanh %43 : vector<8x128xf32>
    %cst_15 = arith.constant dense<0.000000e+00> : vector<128xf32>
    %45 = vector.multi_reduction <add>, %44, %cst_15 [0] : vector<8x128xf32> to vector<128xf32>
    %46 = vector.shape_cast %45 : vector<128xf32> to vector<1x128xf32>
    %47 = arith.mulf %44, %44 : vector<8x128xf32>
    %cst_16 = arith.constant dense<0.000000e+00> : vector<128xf32>
    %48 = vector.multi_reduction <add>, %47, %cst_16 [0] : vector<8x128xf32> to vector<128xf32>
    %49 = vector.shape_cast %48 : vector<128xf32> to vector<1x128xf32>
    %cst_17 = arith.constant 1.250000e-01 : f32
    %50 = vector.broadcast %cst_17 : f32 to vector<1x128xf32>
    %51 = arith.mulf %46, %50 : vector<1x128xf32>
    %cst_18 = arith.constant 1.250000e-01 : f32
    %52 = vector.broadcast %cst_18 : f32 to vector<1x128xf32>
    %53 = arith.mulf %49, %52 : vector<1x128xf32>
    %54 = arith.mulf %51, %51 : vector<1x128xf32>
    %55 = arith.subf %53, %54 : vector<1x128xf32>
    %cst_19 = arith.constant 0.000000e+00 : f32
    %56 = vector.broadcast %cst_19 : f32 to vector<1x128xf32>
    %57 = arith.maximumf %55, %56 : vector<1x128xf32>
    %cst_20 = arith.constant 9.99999974E-6 : f32
    %58 = vector.broadcast %cst_20 : f32 to vector<1x128xf32>
    %59 = arith.addf %57, %58 : vector<1x128xf32>
    %60 = math.rsqrt %59 : vector<1x128xf32>
    %61 = arith.mulf %9, %60 : vector<1x128xf32>
    %62 = arith.mulf %51, %61 : vector<1x128xf32>
    %63 = arith.subf %10, %62 : vector<1x128xf32>
    %64 = vector.broadcast %61 : vector<1x128xf32> to vector<8x128xf32>
    %65 = arith.mulf %44, %64 : vector<8x128xf32>
    %66 = vector.broadcast %63 : vector<1x128xf32> to vector<8x128xf32>
    %67 = arith.addf %65, %66 : vector<8x128xf32>
    %68 = arith.truncf %67 : vector<8x128xf32> to vector<8x128xbf16>
    %cst_21 = arith.constant dense<0.000000e+00> : vector<8x128xf32>
    %69 = tpu.matmul %68, %3, %cst_21 {dimension_numbers = #tpu.dot_dimension_numbers<[1], [0], [0], [1], [0, 0, 1, 1], [], []>} : vector<8x128xbf16>, vector<128x128xbf16>, vector<8x128xf32> -> vector<8x128xf32>
    %70 = vector.broadcast %11 : vector<1x128xf32> to vector<8x128xf32>
    %71 = arith.addf %69, %70 : vector<8x128xf32>
    %72 = math.tanh %71 : vector<8x128xf32>
    %73 = vector.extract_strided_slice %72 {offsets = [0, 0], sizes = [8, 4], strides = [1, 1]} : vector<8x128xf32> to vector<8x4xf32>
    %c0_22 = arith.constant 0 : index
    %c0_23 = arith.constant 0 : index
    %74 = vector.load %arg4[%c0_22, %c0_23] : memref<8x4xf32, #tpu.memory_space<vmem>>, vector<8x4xf32>
    tpu.vector_store %arg4[%c0_22, %c0_23], %73 {strides = array<i32>} : memref<8x4xf32, #tpu.memory_space<vmem>>, vector<8x4xf32>,
    return
  }
}

</mosaic_0001>

<llo_original>
// kernel: actor_forward.1
$region0: #{actor_forward.1}
  #allocation0 [shape = 'u32[]', space=smem, size = 0x4, offset = 0x4, fixed_abs, tag = 'smem constant byte address 0x4 - core index']
  #allocation1 [shape = 'u32[144,128]{1,0:T(1,128)}', space=vmem, size = 0x12000, scoped, tag = 'internal scratch']
  %s0 = inlined_call_operand.hbm [shape: f32[8,16], index: 0, kind: input, shape index: {}]
  %s1 = inlined_call_operand.hbm [shape: bf16[16,128], index: 1, kind: input, shape index: {}]
  %s2 = inlined_call_operand.hbm [shape: bf16[128,256], index: 2, kind: input, shape index: {}]
  %s3 = inlined_call_operand.vmem [shape: f32[7,128], index: 3, kind: input, shape index: {}]
  %s4 = inlined_call_operand.vmem [shape: f32[8,4], index: 4, kind: output, shape index: {}]
  %s5 = sld [smem:[#allocation0]]
  $region38: #{actor_forward.1} parent=0
    _
  %s7 = ssub.s32 1, %s5
  %s8 = scalar_select 0, %s7, %s5
  $region1: #{actor_forward.1} parent=0
    #allocation2 [shape = 'u8[4096]{0}', space=vmem, size = 0x1000, scoped, tag = 'input window, operand 0, single buffered']
    #allocation3 [shape = 's32[1]{0}', space=sflag, size = 0x4, scoped, tag = 'scoped memory for actor_forward.1']
    #allocation4 [shape = 'u8[4096]{0}', space=vmem, size = 0x1000, scoped, tag = 'input window, operand 1, single buffered']
    #allocation5 [shape = 's32[1]{0}', space=sflag, size = 0x4, scoped, tag = 'scoped memory for actor_forward.1']
    #allocation6 [shape = 'u8[65536]{0}', space=vmem, size = 0x10000, scoped, tag = 'input window, operand 2, single buffered']
    %9 = vsyncpa [#allocation3], 0
    %10 = vsyncpa [#allocation5], 0
    // Predicated region
    $region2: #{actor_forward.1} parent=1 // pred_check
      _
    $region3: #{actor_forward.1} parent=1 // pred_check_branch
      %12 = sbr.rel (0) target = $region5
    $region4: #{actor_forward.1} parent=1 // pred_region
      %s14 = ssub.s32 128, 128
      %15 = vsyncadd [#allocation3], %s14
      %s17 = sshll.u32 [#allocation2], 4
      %s18 = int_to_ptr.vmem [resolvable:$true] %s17
      %20 = dma.hbm_to_vmem [thread:$0]  %s0, 128, %s18, [#allocation3]
    $region5: #{actor_forward.1} parent=1 // pred_fallthru
      _
    // Predicated region
    $region6: #{actor_forward.1} parent=1 // pred_check
      _
    $region7: #{actor_forward.1} parent=1 // pred_check_branch
      %22 = sbr.rel (0) target = $region9
    $region8: #{actor_forward.1} parent=1 // pred_region
      %s24 = ssub.s32 128, 128
      %25 = vsyncadd [#allocation5], %s24
      %s26 = sshll.u32 [#allocation4], 4
      %s27 = int_to_ptr.vmem [resolvable:$true] %s26
      %32 = dma.hbm_to_vmem [thread:$0]  %s1, 128, %s27, [#allocation5], 64, 64, 4
    $region9: #{actor_forward.1} parent=1 // pred_fallthru
      _
    // Predicated region
    $region10: #{actor_forward.1} parent=1 // pred_check
      _
    $region11: #{actor_forward.1} parent=1 // pred_check_branch
      %34 = sbr.rel (0) target = $region13
    $region12: #{actor_forward.1} parent=1 // pred_region
      %s36 = ssub.s32 2048, 2048
      %37 = vsyncadd [#allocation5], %s36
      %s38 = sshll.u32 [#allocation6], 4
      %s39 = int_to_ptr.vmem [resolvable:$true] %s38
      %44 = dma.hbm_to_vmem [thread:$0]  %s2, 2048, %s39, [#allocation5], 128, 128, 8
    $region13: #{actor_forward.1} parent=1 // pred_fallthru
      _
    // Predicated region
    $region14: #{actor_forward.1} parent=1 // pred_check
      _
    $region15: #{actor_forward.1} parent=1 // pred_check_branch
      %46 = sbr.rel (0) target = $region17
    $region16: #{actor_forward.1} parent=1 // pred_region
      _
    $region17: #{actor_forward.1} parent=1 // pred_fallthru
      _
    // Predicated region
    $region18: #{actor_forward.1} parent=1 // pred_check
      _
    $region19: #{actor_forward.1} parent=1 // pred_check_branch
      %48 = sbr.rel (0) target = $region21
    $region20: #{actor_forward.1} parent=1 // pred_region
      %49 = dma.done [#allocation3], 128
    $region21: #{actor_forward.1} parent=1 // pred_fallthru
      _
    // Predicated region
    $region22: #{actor_forward.1} parent=1 // pred_check
      _
    $region23: #{actor_forward.1} parent=1 // pred_check_branch
      %51 = sbr.rel (0) target = $region25
    $region24: #{actor_forward.1} parent=1 // pred_region
      %52 = dma.done [#allocation5], 128
    $region25: #{actor_forward.1} parent=1 // pred_fallthru
      _
    // Predicated region
    $region26: #{actor_forward.1} parent=1 // pred_check
      _
    $region27: #{actor_forward.1} parent=1 // pred_check_branch
      %54 = sbr.rel (0) target = $region29
    $region28: #{actor_forward.1} parent=1 // pred_region
      %55 = dma.done [#allocation5], 2048
    $region29: #{actor_forward.1} parent=1 // pred_fallthru
      _
    %v57 = vld [vmem:[#allocation2] sm:$0xff]
    %v58 = vld [vmem:[#allocation4] sm:$0xf]
    %v59 = vld [vmem:[#allocation4 + $0x4] sm:$0xf]
    %v60 = vld [vmem:[#allocation6] sm:$0xf]
    %v61 = vld [vmem:[#allocation6 + $0x8] sm:$0xf]
    %v62 = vld [vmem:[#allocation6 + $0x10] sm:$0xf]
    %v63 = vld [vmem:[#allocation6 + $0x18] sm:$0xf]
    %v64 = vld [vmem:[#allocation6 + $0x20] sm:$0xf]
    %v65 = vld [vmem:[#allocation6 + $0x28] sm:$0xf]
    %v66 = vld [vmem:[#allocation6 + $0x30] sm:$0xf]
    %v67 = vld [vmem:[#allocation6 + $0x38] sm:$0xf]
    %v68 = vld [vmem:[#allocation6 + $0x40] sm:$0xf]
    %v69 = vld [vmem:[#allocation6 + $0x48] sm:$0xf]
    %v70 = vld [vmem:[#allocation6 + $0x50] sm:$0xf]
    %v71 = vld [vmem:[#allocation6 + $0x58] sm:$0xf]
    %v72 = vld [vmem:[#allocation6 + $0x60] sm:$0xf]
    %v73 = vld [vmem:[#allocation6 + $0x68] sm:$0xf]
    %v74 = vld [vmem:[#allocation6 + $0x70] sm:$0xf]
    %v75 = vld [vmem:[#allocation6 + $0x78] sm:$0xf]
    %v76 = vld [vmem:[#allocation6 + $0x4] sm:$0xf]
    %v77 = vld [vmem:[#allocation6 + $0xc] sm:$0xf]
    %v78 = vld [vmem:[#allocation6 + $0x14] sm:$0xf]
    %v79 = vld [vmem:[#allocation6 + $0x1c] sm:$0xf]
    %v80 = vld [vmem:[#allocation6 + $0x24] sm:$0xf]
    %v81 = vld [vmem:[#allocation6 + $0x2c] sm:$0xf]
    %v82 = vld [vmem:[#allocation6 + $0x34] sm:$0xf]
    %v83 = vld [vmem:[#allocation6 + $0x3c] sm:$0xf]
    %v84 = vld [vmem:[#allocation6 + $0x44] sm:$0xf]
    %v85 = vld [vmem:[#allocation6 + $0x4c] sm:$0xf]
    %v86 = vld [vmem:[#allocation6 + $0x54] sm:$0xf]
    %v87 = vld [vmem:[#allocation6 + $0x5c] sm:$0xf]
    %v88 = vld [vmem:[#allocation6 + $0x64] sm:$0xf]
    %v89 = vld [vmem:[#allocation6 + $0x6c] sm:$0xf]
    %v90 = vld [vmem:[#allocation6 + $0x74] sm:$0xf]
    %v91 = vld [vmem:[#allocation6 + $0x7c] sm:$0xf]
    %v92 = vld [vmem:[%s3] sm:$0x7f]
    %v93 = vpack.c.bf16 %v57, %v57
    %v94 = vlaneseq
    %v95 = vshrl.u32 %v94, 7
    %v96 = vsub.s32 0, %v95
    %v97 = vrot.slane %v92, %v96
    %v100 = vunpack.c.l.b16 %v58
    %v101 = vunpack.c.l.b16 %v59
    %v102 = vpack.c.b16 %v101, %v100
    %vm104 = vcmask 130048
    %v106 = vsel %vm104, %v93, 0
    %108 = vmatprep.subr.bf16.mxu0 0
    %109 = vmatpush1.bf16.msra.mxu0 %v102
    %110 = vmatprep.subr.bf16.mxu0 0
    %111 = vmatpush1.bf16.msra.mxu0 0
    %112 = vmatprep.subr.bf16.mxu0 0
    %113 = vmatpush1.bf16.msra.mxu0 0
    %114 = vmatprep.subr.bf16.mxu0 0
    %115 = vmatpush1.bf16.msra.mxu0 0
    %116 = vmatprep.subr.bf16.mxu0 0
    %117 = vmatpush1.bf16.msra.mxu0 0
    %118 = vmatprep.subr.bf16.mxu0 0
    %119 = vmatpush1.bf16.msra.mxu0 0
    %120 = vmatprep.subr.bf16.mxu0 0
    %121 = vmatpush1.bf16.msra.mxu0 0
    %122 = vmatprep.subr.bf16.mxu0 0
    %123 = vmatpush1.bf16.msra.mxu0 0
    %124 = vmatprep.subr.bf16.mxu0 0
    %125 = vmatpush1.bf16.msra.mxu0 0
    %126 = vmatprep.subr.bf16.mxu0 0
    %127 = vmatpush1.bf16.msra.mxu0 0
    %128 = vmatprep.subr.bf16.mxu0 0
    %129 = vmatpush1.bf16.msra.mxu0 0
    %130 = vmatprep.subr.bf16.mxu0 0
    %131 = vmatpush1.bf16.msra.mxu0 0
    %132 = vmatprep.subr.bf16.mxu0 0
    %133 = vmatpush1.bf16.msra.mxu0 0
    %134 = vmatprep.subr.bf16.mxu0 0
    %135 = vmatpush1.bf16.msra.mxu0 0
    %136 = vmatprep.subr.bf16.mxu0 0
    %137 = vmatpush1.bf16.msra.mxu0 0
    %138 = vmatprep.subr.bf16.mxu0 0
    %139 = vmatpush1.bf16.msra.mxu0 0
    %140 = vmatprep.mubr.bf16.mxu0 0
    %141 = vmatmul.mubr.bf16.gmra.mrb[0].mxu0 %v106
    %v142 = vpop.f32.mrb[0].mxu0
    %v143 = vadd.f32 %v97, %v142
    %v144 = vpop.f32.mrb[0].mxu0
    %v145 = vpop.f32.mrb[0].mxu0
    %v146 = vpop.f32.mrb[0].mxu0
    %147 = vdwg.mxu0
    %v148 = vtanh.pop %v143
    %v149 = vrot.slane %v148, 4
    %v150 = vadd.f32 %v148, %v149
    %v151 = vrot.slane %v150, 2
    %v152 = vadd.f32 %v150, %v151
    %v153 = vrot.slane %v152, 1
    %v154 = vadd.f32 %v152, %v153
    %v155 = vmul.f32 %v148, %v148
    %v156 = vrot.slane %v155, 4
    %v157 = vadd.f32 %v155, %v156
    %v158 = vrot.slane %v157, 2
    %v159 = vadd.f32 %v157, %v158
    %v160 = vrot.slane %v159, 1
    %v161 = vadd.f32 %v159, %v160
    %v162 = vmul.f32 %v154, 0.125
    %v163 = vmul.f32 %v161, 0.125
    %v164 = vmul.f32 %v162, %v162
    %v165 = vsub.f32 %v163, %v164
    %v166 = vmax.f32 %v165, 0.0
    %v167 = vadd.f32 %v166, 1e-05
    %v168 = vrsqrt.pop %v167
    %v169 = vmul.f32 %v92, %v168
    %v170 = vmul.f32 %v162, %v169
    %v172 = vrot.slane %v170, 7
    %v174 = vsub.f32 %v92, %v172
    %v175 = vlaneseq
    %v176 = vshrl.u32 %v175, 7
    %v177 = vsub.s32 1, %v176
    %v178 = vrot.slane %v169, %v177
    %v179 = vmul.f32 %v148, %v178
    %v180 = vlaneseq
    %v181 = vshrl.u32 %v180, 7
    %v182 = vsub.s32 2, %v181
    %v183 = vrot.slane %v174, %v182
    %v184 = vadd.f32 %v179, %v183
    %v185 = vpack.c.bf16 %v184, %v184
    %v186 = vlaneseq
    %v187 = vshrl.u32 %v186, 7
    %v188 = vsub.s32 3, %v187
    %v189 = vrot.slane %v92, %v188
    %v206 = vunpack.c.l.b16 %v60
    %v207 = vunpack.c.l.b16 %v61
    %v208 = vunpack.c.l.b16 %v62
    %v209 = vunpack.c.l.b16 %v63
    %v210 = vunpack.c.l.b16 %v64
    %v211 = vunpack.c.l.b16 %v65
    %v212 = vunpack.c.l.b16 %v66
    %v213 = vunpack.c.l.b16 %v67
    %v214 = vunpack.c.l.b16 %v68
    %v215 = vunpack.c.l.b16 %v69
    %v216 = vunpack.c.l.b16 %v70
    %v217 = vunpack.c.l.b16 %v71
    %v218 = vunpack.c.l.b16 %v72
    %v219 = vunpack.c.l.b16 %v73
    %v220 = vunpack.c.l.b16 %v74
    %v221 = vunpack.c.l.b16 %v75
    %v222 = vpack.c.b16 %v207, %v206
    %v223 = vpack.c.b16 %v209, %v208
    %v224 = vpack.c.b16 %v211, %v210
    %v225 = vpack.c.b16 %v213, %v212
    %v226 = vpack.c.b16 %v215, %v214
    %v227 = vpack.c.b16 %v217, %v216
    %v228 = vpack.c.b16 %v219, %v218
    %v229 = vpack.c.b16 %v221, %v220
    %238 = vmatprep.subr.bf16.mxu0 0
    %239 = vmatpush1.bf16.msra.mxu0 %v222
    %240 = vmatprep.subr.bf16.mxu0 0
    %241 = vmatpush1.bf16.msra.mxu0 %v223
    %242 = vmatprep.subr.bf16.mxu0 0
    %243 = vmatpush1.bf16.msra.mxu0 %v224
    %244 = vmatprep.subr.bf16.mxu0 0
    %245 = vmatpush1.bf16.msra.mxu0 %v225
    %246 = vmatprep.subr.bf16.mxu0 0
    %247 = vmatpush1.bf16.msra.mxu0 %v226
    %248 = vmatprep.subr.bf16.mxu0 0
    %249 = vmatpush1.bf16.msra.mxu0 %v227
    %250 = vmatprep.subr.bf16.mxu0 0
    %251 = vmatpush1.bf16.msra.mxu0 %v228
    %252 = vmatprep.subr.bf16.mxu0 0
    %253 = vmatpush1.bf16.msra.mxu0 %v229
    %254 = vmatprep.subr.bf16.mxu0 0
    %255 = vmatpush1.bf16.msra.mxu0 0
    %256 = vmatprep.subr.bf16.mxu0 0
    %257 = vmatpush1.bf16.msra.mxu0 0
    %258 = vmatprep.subr.bf16.mxu0 0
    %259 = vmatpush1.bf16.msra.mxu0 0
    %260 = vmatprep.subr.bf16.mxu0 0
    %261 = vmatpush1.bf16.msra.mxu0 0
    %262 = vmatprep.subr.bf16.mxu0 0
    %263 = vmatpush1.bf16.msra.mxu0 0
    %264 = vmatprep.subr.bf16.mxu0 0
    %265 = vmatpush1.bf16.msra.mxu0 0
    %266 = vmatprep.subr.bf16.mxu0 0
    %267 = vmatpush1.bf16.msra.mxu0 0
    %268 = vmatprep.subr.bf16.mxu0 0
    %269 = vmatpush1.bf16.msra.mxu0 0
    %270 = vmatprep.mubr.bf16.mxu0 0
    %271 = vmatmul.mubr.bf16.gmra.mrb[0].mxu0 %v185
    %v272 = vpop.f32.mrb[0].mxu0
    %v273 = vadd.f32 %v189, %v272
    %v274 = vpop.f32.mrb[0].mxu0
    %v275 = vpop.f32.mrb[0].mxu0
    %v276 = vpop.f32.mrb[0].mxu0
    %277 = vdwg.mxu0
    %v278 = vtanh.pop %v273
    %v279 = vrot.slane %v278, 4
    %v280 = vadd.f32 %v278, %v279
    %v281 = vrot.slane %v280, 2
    %v282 = vadd.f32 %v280, %v281
    %v283 = vrot.slane %v282, 1
    %v284 = vadd.f32 %v282, %v283
    %v285 = vmul.f32 %v278, %v278
    %v286 = vrot.slane %v285, 4
    %v287 = vadd.f32 %v285, %v286
    %v288 = vrot.slane %v287, 2
    %v289 = vadd.f32 %v287, %v288
    %v290 = vrot.slane %v289, 1
    %v291 = vadd.f32 %v289, %v290
    %v292 = vmul.f32 %v284, 0.125
    %v293 = vmul.f32 %v291, 0.125
    %v294 = vmul.f32 %v292, %v292
    %v295 = vsub.f32 %v293, %v294
    %v296 = vmax.f32 %v295, 0.0
    %v297 = vadd.f32 %v296, 1e-05
    %v298 = vrsqrt.pop %v297
    %v299 = vmul.f32 %v92, %v298
    %v300 = vmul.f32 %v292, %v299
    %v302 = vrot.slane %v300, 7
    %v304 = vsub.f32 %v92, %v302
    %v305 = vlaneseq
    %v306 = vshrl.u32 %v305, 7
    %v307 = vsub.s32 4, %v306
    %v308 = vrot.slane %v299, %v307
    %v309 = vmul.f32 %v278, %v308
    %v310 = vlaneseq
    %v311 = vshrl.u32 %v310, 7
    %v312 = vsub.s32 5, %v311
    %v313 = vrot.slane %v304, %v312
    %v314 = vadd.f32 %v309, %v313
    %v315 = vpack.c.bf16 %v314, %v314
    %v316 = vlaneseq
    %v317 = vshrl.u32 %v316, 7
    %v318 = vsub.s32 6, %v317
    %v319 = vrot.slane %v92, %v318
    %v336 = vunpack.c.l.b16 %v76
    %v337 = vunpack.c.l.b16 %v77
    %v338 = vunpack.c.l.b16 %v78
    %v339 = vunpack.c.l.b16 %v79
    %v340 = vunpack.c.l.b16 %v80
    %v341 = vunpack.c.l.b16 %v81
    %v342 = vunpack.c.l.b16 %v82
    %v343 = vunpack.c.l.b16 %v83
    %v344 = vunpack.c.l.b16 %v84
    %v345 = vunpack.c.l.b16 %v85
    %v346 = vunpack.c.l.b16 %v86
    %v347 = vunpack.c.l.b16 %v87
    %v348 = vunpack.c.l.b16 %v88
    %v349 = vunpack.c.l.b16 %v89
    %v350 = vunpack.c.l.b16 %v90
    %v351 = vunpack.c.l.b16 %v91
    %v352 = vpack.c.b16 %v337, %v336
    %v353 = vpack.c.b16 %v339, %v338
    %v354 = vpack.c.b16 %v341, %v340
    %v355 = vpack.c.b16 %v343, %v342
    %v356 = vpack.c.b16 %v345, %v344
    %v357 = vpack.c.b16 %v347, %v346
    %v358 = vpack.c.b16 %v349, %v348
    %v359 = vpack.c.b16 %v351, %v350
    %368 = vmatprep.subr.bf16.mxu0 0
    %369 = vmatpush1.bf16.msra.mxu0 %v352
    %370 = vmatprep.subr.bf16.mxu0 0
    %371 = vmatpush1.bf16.msra.mxu0 %v353
    %372 = vmatprep.subr.bf16.mxu0 0
    %373 = vmatpush1.bf16.msra.mxu0 %v354
    %374 = vmatprep.subr.bf16.mxu0 0
    %375 = vmatpush1.bf16.msra.mxu0 %v355
    %376 = vmatprep.subr.bf16.mxu0 0
    %377 = vmatpush1.bf16.msra.mxu0 %v356
    %378 = vmatprep.subr.bf16.mxu0 0
    %379 = vmatpush1.bf16.msra.mxu0 %v357
    %380 = vmatprep.subr.bf16.mxu0 0
    %381 = vmatpush1.bf16.msra.mxu0 %v358
    %382 = vmatprep.subr.bf16.mxu0 0
    %383 = vmatpush1.bf16.msra.mxu0 %v359
    %384 = vmatprep.subr.bf16.mxu0 0
    %385 = vmatpush1.bf16.msra.mxu0 0
    %386 = vmatprep.subr.bf16.mxu0 0
    %387 = vmatpush1.bf16.msra.mxu0 0
    %388 = vmatprep.subr.bf16.mxu0 0
    %389 = vmatpush1.bf16.msra.mxu0 0
    %390 = vmatprep.subr.bf16.mxu0 0
    %391 = vmatpush1.bf16.msra.mxu0 0
    %392 = vmatprep.subr.bf16.mxu0 0
    %393 = vmatpush1.bf16.msra.mxu0 0
    %394 = vmatprep.subr.bf16.mxu0 0
    %395 = vmatpush1.bf16.msra.mxu0 0
    %396 = vmatprep.subr.bf16.mxu0 0
    %397 = vmatpush1.bf16.msra.mxu0 0
    %398 = vmatprep.subr.bf16.mxu0 0
    %399 = vmatpush1.bf16.msra.mxu0 0
    %400 = vmatprep.mubr.bf16.mxu0 0
    %401 = vmatmul.mubr.bf16.gmra.mrb[0].mxu0 %v315
    %v402 = vpop.f32.mrb[0].mxu0
    %v403 = vadd.f32 %v319, %v402
    %v404 = vpop.f32.mrb[0].mxu0
    %v405 = vpop.f32.mrb[0].mxu0
    %v406 = vpop.f32.mrb[0].mxu0
    %407 = vdwg.mxu0
    %v408 = vtanh.pop %v403
    %vm409 = vcmask 31744
    %410 = vst.msk [vmem:[%s4] sm:$0xff] %vm409, %v408
    // Predicated region
    $region30: #{actor_forward.1} parent=1 // pred_check
      _
    $region31: #{actor_forward.1} parent=1 // pred_check_branch
      %412 = sbr.rel (0) target = $region33
    $region32: #{actor_forward.1} parent=1 // pred_region
      _
    $region33: #{actor_forward.1} parent=1 // pred_fallthru
      _
    // Predicated region
    $region34: #{actor_forward.1} parent=1 // pred_check
      _
    $region35: #{actor_forward.1} parent=1 // pred_check_branch
      %414 = sbr.rel (0) target = $region37
    $region36: #{actor_forward.1} parent=1 // pred_region
      _
    $region37: #{actor_forward.1} parent=1 // pred_fallthru
      _
    %415 = vsyncpa [#allocation3], 1
    %416 = vsyncpa [#allocation5], 1

</llo_original>
